<compile_context>
chip_gen: v6e
topology: v6e:2x2x1
jax: 0.10.0
libtpu: 0.0.40
codegen_flags: <defaults>
</compile_context>

<pallas_src>
import math

import jax
import jax.numpy as jnp
from jax.experimental import pallas as pl
from jax.experimental.pallas import tpu as pltpu


def _round_up(x: int, m: int) -> int:
    return ((x + m - 1) // m) * m


def _make_lora_kernel(tk: int):
    """Kernel factory: tk captured so the resident Wa can be sliced with pl.ds."""

    def _lora_kernel(x_ref, w_ref, b_ref, wa_ref, wb_ref, o_ref, acc_ref, a_ref):
        # Grid = (m, n, k): m row tiles (parallel), n out-col tiles, k reduction.
        n = pl.program_id(1)
        k = pl.program_id(2)
        last_k = pl.num_programs(2) - 1

        @pl.when(k == 0)
        def _init_acc():
            acc_ref[...] = jnp.zeros_like(acc_ref)

        @pl.when(jnp.logical_and(n == 0, k == 0))
        def _init_a():
            a_ref[...] = jnp.zeros_like(a_ref)

        x = x_ref[...]

        # Frozen base path: accumulate x @ W over the K grid axis in f32.
        acc_ref[...] += jnp.dot(x, w_ref[...], preferred_element_type=jnp.float32)

        # LoRA down-projection a = x @ Wa: computed once per row tile (only while
        # n == 0) and kept resident in VMEM scratch for all n tiles of this m.
        # Wa is fully VMEM-resident; slice the k-th (tk, r_pad) block of it.
        @pl.when(n == 0)
        def _lora_down():
            k_off = pl.multiple_of(k * tk, tk)
            wa_blk = wa_ref[pl.ds(k_off, tk), :]
            a_ref[...] += jnp.dot(x, wa_blk, preferred_element_type=jnp.float32)

        # Epilogue: LoRA up-projection (scale already folded into Wb), bias, store.
        @pl.when(k == last_k)
        def _epilogue():
            lora = jnp.dot(a_ref[...].astype(wb_ref.dtype), wb_ref[...],
                           preferred_element_type=jnp.float32)
            o_ref[...] = (acc_ref[...] + lora + b_ref[...]).astype(o_ref.dtype)

    return _lora_kernel


def prepare_lora_linear(w, b, w_a, w_b, r: int, alpha: int,
                        compute_dtype=jnp.bfloat16,
                        tn_max: int = 512, tk_max: int = 512):
    """One-time weight preparation (do NOT call per forward step):
       transpose to row-major RHS layout, fold the static LoRA scale into Wb,
       zero-pad D_in/D_out to the tile grid (and r up to a lane-dense 128),
       cast to the MXU compute dtype.
    """
    D_out, D_in = w.shape
    assert w_a.shape == (r, D_in) and w_b.shape == (D_out, r) and b.shape == (D_out,)
    scale = float(alpha // r)  # static int floor-div, matches PyTorch `alpha // self.r`

    tn = min(tn_max, _round_up(D_out, 128))
    tk = min(tk_max, _round_up(D_in, 128))
    r_pad = _round_up(r, 128)            # lane-dense LoRA intermediate
    D_out_p = _round_up(D_out, tn)
    D_in_p = _round_up(D_in, tk)

    w_t = jnp.asarray(w, jnp.float32).T                  # (D_in, D_out)
    wa_t = jnp.asarray(w_a, jnp.float32).T               # (D_in, r)
    wb_t = jnp.asarray(w_b, jnp.float32).T * scale       # (r, D_out), scale folded

    w_t = jnp.pad(w_t, ((0, D_in_p - D_in), (0, D_out_p - D_out))).astype(compute_dtype)
    wa_t = jnp.pad(wa_t, ((0, D_in_p - D_in), (0, r_pad - r))).astype(compute_dtype)
    wb_t = jnp.pad(wb_t, ((0, r_pad - r), (0, D_out_p - D_out))).astype(compute_dtype)
    b_p = jnp.pad(jnp.asarray(b, jnp.float32), (0, D_out_p - D_out)).reshape(1, D_out_p)

    params = (w_t, b_p, wa_t, wb_t)
    meta = dict(D_in=D_in, D_out=D_out, D_in_p=D_in_p, D_out_p=D_out_p,
                r_pad=r_pad, tn=tn, tk=tk, compute_dtype=compute_dtype)
    return params, meta


def lora_linear(x, params, meta, tm_max: int = 512, out_dtype=None,
                vmem_limit_bytes=None):
    """Apply the fused LoRA linear. x: (..., D_in) -> (..., D_out)."""
    w_t, b_p, wa_t, wb_t = params
    D_in, D_out = meta["D_in"], meta["D_out"]
    D_in_p, D_out_p = meta["D_in_p"], meta["D_out_p"]
    r_pad, tn, tk = meta["r_pad"], meta["tn"], meta["tk"]
    cdt = meta["compute_dtype"]
    out_dtype = out_dtype if out_dtype is not None else x.dtype

    lead_shape = x.shape[:-1]
    assert x.shape[-1] == D_in
    M = math.prod(lead_shape)

    # bf16 vregs pack [16,128] -> round rows to 16 for bf16, 8 for f32.
    row_align = 16 if cdt == jnp.bfloat16 else 8
    tm = min(tm_max, _round_up(M, row_align))
    M_p = _round_up(M, tm)

    x2d = x.reshape(M, D_in)
    if x2d.dtype != cdt:
        x2d = x2d.astype(cdt)
    if M_p != M or D_in_p != D_in:   # skip the pad copy when it's a no-op
        x2d = jnp.pad(x2d, ((0, M_p - M), (0, D_in_p - D_in)))

    num_m = M_p // tm
    num_n = D_out_p // tn
    num_k = D_in_p // tk

    out = pl.pallas_call(
        _make_lora_kernel(tk),
        out_shape=jax.ShapeDtypeStruct((M_p, D_out_p), out_dtype),
        grid_spec=pltpu.PrefetchScalarGridSpec(
            num_scalar_prefetch=0,
            # m outer (megacore-parallel), n middle, k inner (reduction).
            grid=(num_m, num_n, num_k),
            in_specs=[
                pl.BlockSpec((tm, tk), lambda m, n, k: (m, k)),        # x tile
                pl.BlockSpec((tk, tn), lambda m, n, k: (k, n)),        # W tile
                pl.BlockSpec((1, tn), lambda m, n, k: (0, n)),         # bias tile
                # Wa: fully VMEM-resident (constant block index -> fetched once),
                # sliced per-k inside the kernel with pl.ds.
                pl.BlockSpec((D_in_p, r_pad), lambda m, n, k: (0, 0)),
                pl.BlockSpec((r_pad, tn), lambda m, n, k: (0, n)),     # Wb (scaled)
            ],
            out_specs=pl.BlockSpec((tm, tn), lambda m, n, k: (m, n)),
            scratch_shapes=[
                pltpu.VMEM((tm, tn), jnp.float32),     # base-path f32 accumulator
                pltpu.VMEM((tm, r_pad), jnp.float32),  # LoRA a = x @ Wa accumulator
            ],
        ),
        compiler_params=pltpu.CompilerParams(
            # Only m is "parallel": the LoRA `a` scratch carries a dependency
            # across n (computed at n == 0, reused for n > 0) and across k.
            dimension_semantics=("parallel", "arbitrary", "arbitrary"),
            vmem_limit_bytes=vmem_limit_bytes,
        ),
    )(x2d, w_t, b_p, wa_t, wb_t)

    if M_p != M or D_out_p != D_out:
        out = out[:M, :D_out]
    return out.reshape(*lead_shape, D_out)


if __name__ == "__main__":
    # Small deterministic setup consistent with the module's forward.
    B, S, D_in, D_out = 2, 8, 32, 32
    r, alpha = 8, 16

    key = jax.random.PRNGKey(0)
    kx, kw, kb, ka, kkb = jax.random.split(key, 5)

    x = jax.random.normal(kx, (B, S, D_in), dtype=jnp.float32)
    w = jax.random.normal(kw, (D_out, D_in), dtype=jnp.float32) * 0.1
    b = jax.random.normal(kb, (D_out,), dtype=jnp.float32) * 0.1
    w_a = jax.random.normal(ka, (r, D_in), dtype=jnp.float32) * 0.1
    w_b = jax.random.normal(kkb, (D_out, r), dtype=jnp.float32) * 0.1

    # Reference in plain JAX (same math as the PyTorch forward, fp32).
    ref = (x @ w.T + b) + (alpha // r) * ((x @ w_a.T) @ w_b.T)

    # f32 compute path: tight parity with the fp32 reference.
    params32, meta32 = prepare_lora_linear(w, b, w_a, w_b, r, alpha,
                                           compute_dtype=jnp.float32)
    y32 = jax.block_until_ready(lora_linear(x, params32, meta32))
    assert y32.shape == (B, S, D_out)
    assert jnp.allclose(y32, ref, atol=1e-4, rtol=1e-4), "f32 path mismatch vs reference"

    # bf16 compute path (MXU peak rate, f32 accumulation): relaxed tolerance.
    params16, meta16 = prepare_lora_linear(w, b, w_a, w_b, r, alpha,
                                           compute_dtype=jnp.bfloat16)
    y16 = jax.block_until_ready(lora_linear(x, params16, meta16))
    assert y16.shape == (B, S, D_out)
    assert jnp.allclose(y16, ref, atol=5e-2, rtol=5e-2), "bf16 path mismatch vs reference"

    print("KERNEL_OK")
</pallas_src>

<mosaic_0001>
module attributes {stable_mosaic.version = 11 : i64} {
  func.func @_lora_kernel(%arg0: i32, %arg1: i32, %arg2: i32, %arg3: memref<16x128xf32, #tpu.memory_space<vmem>>, %arg4: memref<128x128xf32, #tpu.memory_space<vmem>>, %arg5: memref<1x128xf32, #tpu.memory_space<vmem>>, %arg6: memref<128x128xf32, #tpu.memory_space<vmem>>, %arg7: memref<128x128xf32, #tpu.memory_space<vmem>>, %arg8: memref<16x128xf32, #tpu.memory_space<vmem>>, %arg9: memref<16x128xf32, #tpu.memory_space<vmem>>, %arg10: memref<16x128xf32, #tpu.memory_space<vmem>>) attributes {dimension_semantics = [#tpu.dimension_semantics<parallel>, #tpu.dimension_semantics<arbitrary>, #tpu.dimension_semantics<arbitrary>], iteration_bounds = array<i64: 1, 1, 1>, scalar_prefetch = 0 : i64, scratch_operands = 2 : i64, tpu.core_type = #tpu.core_type<tc>, window_params = [{transform_indices = @transform_0, window_bounds = array<i64: 16, 128>}, {transform_indices = @transform_1, window_bounds = array<i64: 128, 128>}, {transform_indices = @transform_2, window_bounds = array<i64: 1, 128>}, {pipeline_mode = #tpu.pipeline_mode<synchronous>, transform_indices = @transform_3, window_bounds = array<i64: 128, 128>}, {transform_indices = @transform_4, window_bounds = array<i64: 128, 128>}, {transform_indices = @transform_5, window_bounds = array<i64: 16, 128>}]} {
    %c0_i32 = arith.constant 0 : i32
    %0 = arith.cmpi eq, %arg2, %c0_i32 : i32
    %1 = arith.extui %0 : i1 to i32
    %c0_i32_0 = arith.constant 0 : i32
    %2 = arith.cmpi ne, %1, %c0_i32_0 : i32
    scf.if %2 {
      %cst_15 = arith.constant 0.000000e+00 : f32
      %20 = vector.broadcast %cst_15 : f32 to vector<16x128xf32>
      %c0_16 = arith.constant 0 : index
      %c0_17 = arith.constant 0 : index
      %21 = vector.load %arg9[%c0_16, %c0_17] : memref<16x128xf32, #tpu.memory_space<vmem>>, vector<16x128xf32>
      tpu.vector_store %arg9[%c0_16, %c0_17], %20 {strides = array<i32>} : memref<16x128xf32, #tpu.memory_space<vmem>>, vector<16x128xf32>,
    } else {
    }
    %c0_i32_1 = arith.constant 0 : i32
    %3 = arith.cmpi eq, %arg1, %c0_i32_1 : i32
    %c0_i32_2 = arith.constant 0 : i32
    %4 = arith.cmpi eq, %arg2, %c0_i32_2 : i32
    %5 = arith.andi %3, %4 : i1
    %6 = arith.extui %5 : i1 to i32
    %c0_i32_3 = arith.constant 0 : i32
    %7 = arith.cmpi ne, %6, %c0_i32_3 : i32
    scf.if %7 {
      %cst_15 = arith.constant 0.000000e+00 : f32
      %20 = vector.broadcast %cst_15 : f32 to vector<16x128xf32>
      %c0_16 = arith.constant 0 : index
      %c0_17 = arith.constant 0 : index
      %21 = vector.load %arg10[%c0_16, %c0_17] : memref<16x128xf32, #tpu.memory_space<vmem>>, vector<16x128xf32>
      tpu.vector_store %arg10[%c0_16, %c0_17], %20 {strides = array<i32>} : memref<16x128xf32, #tpu.memory_space<vmem>>, vector<16x128xf32>,
    } else {
    }
    %c0 = arith.constant 0 : index
    %c0_4 = arith.constant 0 : index
    %8 = vector.load %arg3[%c0, %c0_4] : memref<16x128xf32, #tpu.memory_space<vmem>>, vector<16x128xf32>
    %c0_5 = arith.constant 0 : index
    %c0_6 = arith.constant 0 : index
    %9 = vector.load %arg9[%c0_5, %c0_6] : memref<16x128xf32, #tpu.memory_space<vmem>>, vector<16x128xf32>
    %c0_7 = arith.constant 0 : index
    %c0_8 = arith.constant 0 : index
    %10 = vector.load %arg4[%c0_7, %c0_8] : memref<128x128xf32, #tpu.memory_space<vmem>>, vector<128x128xf32>
    %cst = arith.constant dense<0.000000e+00> : vector<16x128xf32>
    %11 = tpu.matmul %8, %10, %cst {dimension_numbers = #tpu.dot_dimension_numbers<[1], [0], [0], [1], [0, 0, 1, 1], [], []>} : vector<16x128xf32>, vector<128x128xf32>, vector<16x128xf32> -> vector<16x128xf32>
    %12 = arith.addf %9, %11 : vector<16x128xf32>
    %c0_9 = arith.constant 0 : index
    %c0_10 = arith.constant 0 : index
    %13 = vector.load %arg9[%c0_9, %c0_10] : memref<16x128xf32, #tpu.memory_space<vmem>>, vector<16x128xf32>
    tpu.vector_store %arg9[%c0_9, %c0_10], %12 {strides = array<i32>} : memref<16x128xf32, #tpu.memory_space<vmem>>, vector<16x128xf32>,
    %c0_i32_11 = arith.constant 0 : i32
    %14 = arith.cmpi eq, %arg1, %c0_i32_11 : i32
    %15 = arith.extui %14 : i1 to i32
    %c0_i32_12 = arith.constant 0 : i32
    %16 = arith.cmpi ne, %15, %c0_i32_12 : i32
    scf.if %16 {
      %c128_i32 = arith.constant 128 : i32
      %20 = arith.muli %arg2, %c128_i32 : i32
      %21 = tpu.assume_multiple %20, 128 : i32
      %22 = arith.index_cast %21 : i32 to index
      %c0_15 = arith.constant 0 : index
      %23 = vector.load %arg6[%22, %c0_15] : memref<128x128xf32, #tpu.memory_space<vmem>>, vector<128x128xf32>
      %c0_16 = arith.constant 0 : index
      %c0_17 = arith.constant 0 : index
      %24 = vector.load %arg10[%c0_16, %c0_17] : memref<16x128xf32, #tpu.memory_space<vmem>>, vector<16x128xf32>
      %cst_18 = arith.constant dense<0.000000e+00> : vector<16x128xf32>
      %25 = tpu.matmul %8, %23, %cst_18 {dimension_numbers = #tpu.dot_dimension_numbers<[1], [0], [0], [1], [0, 0, 1, 1], [], []>} : vector<16x128xf32>, vector<128x128xf32>, vector<16x128xf32> -> vector<16x128xf32>
      %26 = arith.addf %24, %25 : vector<16x128xf32>
      %c0_19 = arith.constant 0 : index
      %c0_20 = arith.constant 0 : index
      %27 = vector.load %arg10[%c0_19, %c0_20] : memref<16x128xf32, #tpu.memory_space<vmem>>, vector<16x128xf32>
      tpu.vector_store %arg10[%c0_19, %c0_20], %26 {strides = array<i32>} : memref<16x128xf32, #tpu.memory_space<vmem>>, vector<16x128xf32>,
    } else {
    }
    %c0_i32_13 = arith.constant 0 : i32
    %17 = arith.cmpi eq, %arg2, %c0_i32_13 : i32
    %18 = arith.extui %17 : i1 to i32
    %c0_i32_14 = arith.constant 0 : i32
    %19 = arith.cmpi ne, %18, %c0_i32_14 : i32
    scf.if %19 {
      %c0_15 = arith.constant 0 : index
      %c0_16 = arith.constant 0 : index
      %20 = vector.load %arg10[%c0_15, %c0_16] : memref<16x128xf32, #tpu.memory_space<vmem>>, vector<16x128xf32>
      %c0_17 = arith.constant 0 : index
      %c0_18 = arith.constant 0 : index
      %21 = vector.load %arg7[%c0_17, %c0_18] : memref<128x128xf32, #tpu.memory_space<vmem>>, vector<128x128xf32>
      %cst_19 = arith.constant dense<0.000000e+00> : vector<16x128xf32>
      %22 = tpu.matmul %20, %21, %cst_19 {dimension_numbers = #tpu.dot_dimension_numbers<[1], [0], [0], [1], [0, 0, 1, 1], [], []>} : vector<16x128xf32>, vector<128x128xf32>, vector<16x128xf32> -> vector<16x128xf32>
      %c0_20 = arith.constant 0 : index
      %c0_21 = arith.constant 0 : index
      %23 = vector.load %arg9[%c0_20, %c0_21] : memref<16x128xf32, #tpu.memory_space<vmem>>, vector<16x128xf32>
      %24 = arith.addf %23, %22 : vector<16x128xf32>
      %c0_22 = arith.constant 0 : index
      %c0_23 = arith.constant 0 : index
      %25 = vector.load %arg5[%c0_22, %c0_23] : memref<1x128xf32, #tpu.memory_space<vmem>>, vector<1x128xf32>
      %26 = vector.broadcast %25 : vector<1x128xf32> to vector<16x128xf32>
      %27 = arith.addf %24, %26 : vector<16x128xf32>
      %c0_24 = arith.constant 0 : index
      %c0_25 = arith.constant 0 : index
      %28 = vector.load %arg8[%c0_24, %c0_25] : memref<16x128xf32, #tpu.memory_space<vmem>>, vector<16x128xf32>
      tpu.vector_store %arg8[%c0_24, %c0_25], %27 {strides = array<i32>} : memref<16x128xf32, #tpu.memory_space<vmem>>, vector<16x128xf32>,
    } else {
    }
    return
  }
  func.func @transform_0(%arg0: i32, %arg1: i32, %arg2: i32) -> (i32, i32) {
    %c0_i32 = arith.constant 0 : i32
    return %arg0, %arg2 : i32, i32
  }
  func.func @transform_1(%arg0: i32, %arg1: i32, %arg2: i32) -> (i32, i32) {
    %c0_i32 = arith.constant 0 : i32
    return %arg2, %arg1 : i32, i32
  }
  func.func @transform_2(%arg0: i32, %arg1: i32, %arg2: i32) -> (i32, i32) {
    %c0_i32 = arith.constant 0 : i32
    %c0_i32_0 = arith.constant 0 : i32
    return %c0_i32, %arg1 : i32, i32
  }
  func.func @transform_3(%arg0: i32, %arg1: i32, %arg2: i32) -> (i32, i32) {
    %c0_i32 = arith.constant 0 : i32
    %c0_i32_0 = arith.constant 0 : i32
    %c0_i32_1 = arith.constant 0 : i32
    return %c0_i32, %c0_i32_0 : i32, i32
  }
  func.func @transform_4(%arg0: i32, %arg1: i32, %arg2: i32) -> (i32, i32) {
    %c0_i32 = arith.constant 0 : i32
    %c0_i32_0 = arith.constant 0 : i32
    return %c0_i32, %arg1 : i32, i32
  }
  func.func @transform_5(%arg0: i32, %arg1: i32, %arg2: i32) -> (i32, i32) {
    %c0_i32 = arith.constant 0 : i32
    return %arg0, %arg1 : i32, i32
  }
}

</mosaic_0001>

<llo_original>
// kernel: tpu_custom_call.1
$region0: #{tpu_custom_call.1}
  #allocation0 [shape = 'u32[]', space=smem, size = 0x4, offset = 0x4, fixed_abs, tag = 'smem constant byte address 0x4 - core index']
  #allocation1 [shape = 'u32[144,128]{1,0:T(1,128)}', space=vmem, size = 0x12000, scoped, tag = 'internal scratch']
  #allocation2 [shape = 'f32[16,128]{1,0:T(8,128)}', space=vmem, size = 0x2000, scoped, tag = 'scratch operand']
  #allocation3 [shape = 'f32[16,128]{1,0:T(8,128)}', space=vmem, size = 0x2000, scoped, tag = 'scratch operand']
  %s0 = inlined_call_operand.hbm [shape: f32[16,128], index: 0, kind: input, shape index: {}]
  %s1 = inlined_call_operand.hbm [shape: f32[128,128], index: 1, kind: input, shape index: {}]
  %s2 = inlined_call_operand.vmem [shape: f32[1,128], index: 2, kind: input, shape index: {}]
  %s3 = inlined_call_operand.hbm [shape: f32[128,128], index: 3, kind: input, shape index: {}]
  %s4 = inlined_call_operand.hbm [shape: f32[128,128], index: 4, kind: input, shape index: {}]
  %s5 = inlined_call_operand.hbm [shape: f32[16,128], index: 5, kind: output, shape index: {}]
  %s6 = sld [smem:[#allocation0]]
  $region62: #{tpu_custom_call.1} parent=0
    _
  %s8 = ssub.s32 1, %s6
  %s9 = scalar_select 0, %s8, %s6
  $region1: #{tpu_custom_call.1} parent=0
    #allocation4 [shape = 'u8[8192]{0}', space=vmem, size = 0x2000, scoped, tag = 'input window, operand 0, single buffered']
    #allocation5 [shape = 's32[1]{0}', space=sflag, size = 0x4, scoped, tag = 'scoped memory for tpu_custom_call.1']
    #allocation6 [shape = 's32[1]{0}', space=sflag, size = 0x4, scoped, tag = 'scoped memory for tpu_custom_call.1']
    #allocation7 [shape = 'u8[65536]{0}', space=vmem, size = 0x10000, scoped, tag = 'input window, operand 1, single buffered']
    #allocation8 [shape = 's32[1]{0}', space=sflag, size = 0x4, scoped, tag = 'scoped memory for tpu_custom_call.1']
    #allocation9 [shape = 'u8[65536]{0}', space=vmem, size = 0x10000, scoped, tag = 'input window, operand 3, single buffered']
    #allocation10 [shape = 'u8[65536]{0}', space=vmem, size = 0x10000, scoped, tag = 'input window, operand 4, single buffered']
    #allocation11 [shape = 's32[1]{0}', space=sflag, size = 0x4, scoped, tag = 'scoped memory for tpu_custom_call.1']
    #allocation12 [shape = 'u8[8192]{0}', space=vmem, size = 0x2000, scoped, tag = 'output window, operand 0, single buffered']
    %10 = vsyncpa [#allocation5], 0
    %11 = vsyncpa [#allocation8], 0
    %12 = vsyncpa [#allocation11], 0
    %13 = vsyncpa [#allocation6], 0
    // Predicated region
    $region2: #{tpu_custom_call.1} parent=1 // pred_check
      _
    $region3: #{tpu_custom_call.1} parent=1 // pred_check_branch
      %15 = sbr.rel (0) target = $region5
    $region4: #{tpu_custom_call.1} parent=1 // pred_region
      %s17 = ssub.s32 256, 256
      %18 = vsyncadd [#allocation5], %s17
      %s19 = sshll.u32 [#allocation4], 4
      %s20 = int_to_ptr.vmem [resolvable:$true] %s19
      %25 = dma.hbm_to_vmem [thread:$0]  %s0, 256, %s20, [#allocation5], 128, 128, 8
    $region5: #{tpu_custom_call.1} parent=1 // pred_fallthru
      _
    // Predicated region
    $region6: #{tpu_custom_call.1} parent=1 // pred_check
      _
    $region7: #{tpu_custom_call.1} parent=1 // pred_check_branch
      %27 = sbr.rel (0) target = $region9
    $region8: #{tpu_custom_call.1} parent=1 // pred_region
      %s29 = ssub.s32 2048, 2048
      %30 = vsyncadd [#allocation8], %s29
      %s31 = sshll.u32 [#allocation7], 4
      %s32 = int_to_ptr.vmem [resolvable:$true] %s31
      %37 = dma.hbm_to_vmem [thread:$0]  %s1, 2048, %s32, [#allocation8], 128, 128, 8
    $region9: #{tpu_custom_call.1} parent=1 // pred_fallthru
      _
    // Predicated region
    $region10: #{tpu_custom_call.1} parent=1 // pred_check
      _
    $region11: #{tpu_custom_call.1} parent=1 // pred_check_branch
      %39 = sbr.rel (0) target = $region13
    $region12: #{tpu_custom_call.1} parent=1 // pred_region
      _
    $region13: #{tpu_custom_call.1} parent=1 // pred_fallthru
      _
    // Predicated region
    $region14: #{tpu_custom_call.1} parent=1 // pred_check
      _
    $region15: #{tpu_custom_call.1} parent=1 // pred_check_branch
      %41 = sbr.rel (0) target = $region17
    $region16: #{tpu_custom_call.1} parent=1 // pred_region
      %s43 = ssub.s32 2048, 2048
      %44 = vsyncadd [#allocation8], %s43
      %s45 = sshll.u32 [#allocation9], 4
      %s46 = int_to_ptr.vmem [resolvable:$true] %s45
      %51 = dma.hbm_to_vmem [thread:$0]  %s3, 2048, %s46, [#allocation8], 128, 128, 8
    $region17: #{tpu_custom_call.1} parent=1 // pred_fallthru
      _
    // Predicated region
    $region18: #{tpu_custom_call.1} parent=1 // pred_check
      _
    $region19: #{tpu_custom_call.1} parent=1 // pred_check_branch
      %53 = sbr.rel (0) target = $region21
    $region20: #{tpu_custom_call.1} parent=1 // pred_region
      %s55 = ssub.s32 2048, 2048
      %56 = vsyncadd [#allocation11], %s55
      %s57 = sshll.u32 [#allocation10], 4
      %s58 = int_to_ptr.vmem [resolvable:$true] %s57
      %63 = dma.hbm_to_vmem [thread:$0]  %s4, 2048, %s58, [#allocation11], 128, 128, 8
    $region21: #{tpu_custom_call.1} parent=1 // pred_fallthru
      _
    // Predicated region
    $region22: #{tpu_custom_call.1} parent=1 // pred_check
      _
    $region23: #{tpu_custom_call.1} parent=1 // pred_check_branch
      %65 = sbr.rel (0) target = $region25
    $region24: #{tpu_custom_call.1} parent=1 // pred_region
      %66 = dma.done [#allocation5], 256
    $region25: #{tpu_custom_call.1} parent=1 // pred_fallthru
      _
    // Predicated region
    $region26: #{tpu_custom_call.1} parent=1 // pred_check
      _
    $region27: #{tpu_custom_call.1} parent=1 // pred_check_branch
      %68 = sbr.rel (0) target = $region29
    $region28: #{tpu_custom_call.1} parent=1 // pred_region
      %69 = dma.done [#allocation8], 2048
    $region29: #{tpu_custom_call.1} parent=1 // pred_fallthru
      _
    // Predicated region
    $region30: #{tpu_custom_call.1} parent=1 // pred_check
      _
    $region31: #{tpu_custom_call.1} parent=1 // pred_check_branch
      %71 = sbr.rel (0) target = $region33
    $region32: #{tpu_custom_call.1} parent=1 // pred_region
      %72 = dma.done [#allocation8], 2048
    $region33: #{tpu_custom_call.1} parent=1 // pred_fallthru
      _
    // Predicated region
    $region34: #{tpu_custom_call.1} parent=1 // pred_check
      _
    $region35: #{tpu_custom_call.1} parent=1 // pred_check_branch
      %74 = sbr.rel (0) target = $region37
    $region36: #{tpu_custom_call.1} parent=1 // pred_region
      %75 = dma.done [#allocation11], 2048
    $region37: #{tpu_custom_call.1} parent=1 // pred_fallthru
      _
    %p76 = scmp.eq.s32.totalorder 0, 0
    // Predicated region
    $region38: #{tpu_custom_call.1} parent=1 // pred_check
      %p77 = pneg %p76
    $region39: #{tpu_custom_call.1} parent=1 // pred_check_branch
      %79 = sbr.rel (%p77) target = $region41
    $region40: #{tpu_custom_call.1} parent=1 // pred_region
      %80 = vst [vmem:[#allocation2] sm:$0xff] 0.0
      %81 = vst [vmem:[#allocation2 + $0x8] sm:$0xff] 0.0
    $region41: #{tpu_custom_call.1} parent=1 // pred_fallthru
      _
    %p82 = scmp.eq.s32.totalorder 0, 0
    %p83 = pnand %p82, %p76
    %p84 = pneg %p83
    // Predicated region
    $region42: #{tpu_custom_call.1} parent=1 // pred_check
      _
    $region43: #{tpu_custom_call.1} parent=1 // pred_check_branch
      %86 = sbr.rel (%p83) target = $region45
    $region44: #{tpu_custom_call.1} parent=1 // pred_region
      %87 = vst [vmem:[#allocation3] sm:$0xff] 0.0
      %88 = vst [vmem:[#allocation3 + $0x8] sm:$0xff] 0.0
    $region45: #{tpu_custom_call.1} parent=1 // pred_fallthru
      _
    %v89 = vld [vmem:[#allocation4] sm:$0xff]
    %v90 = vld [vmem:[#allocation4 + $0x8] sm:$0xff]
    %v91 = vld [vmem:[#allocation2] sm:$0xff]
    %v92 = vld [vmem:[#allocation2 + $0x8] sm:$0xff]
    %v93 = vld [vmem:[#allocation7] sm:$0xff]
    %v94 = vld [vmem:[#allocation7 + $0x8] sm:$0xff]
    %v95 = vld [vmem:[#allocation7 + $0x10] sm:$0xff]
    %v96 = vld [vmem:[#allocation7 + $0x18] sm:$0xff]
    %v97 = vld [vmem:[#allocation7 + $0x20] sm:$0xff]
    %v98 = vld [vmem:[#allocation7 + $0x28] sm:$0xff]
    %v99 = vld [vmem:[#allocation7 + $0x30] sm:$0xff]
    %v100 = vld [vmem:[#allocation7 + $0x38] sm:$0xff]
    %v101 = vld [vmem:[#allocation7 + $0x40] sm:$0xff]
    %v102 = vld [vmem:[#allocation7 + $0x48] sm:$0xff]
    %v103 = vld [vmem:[#allocation7 + $0x50] sm:$0xff]
    %v104 = vld [vmem:[#allocation7 + $0x58] sm:$0xff]
    %v105 = vld [vmem:[#allocation7 + $0x60] sm:$0xff]
    %v106 = vld [vmem:[#allocation7 + $0x68] sm:$0xff]
    %v107 = vld [vmem:[#allocation7 + $0x70] sm:$0xff]
    %v108 = vld [vmem:[#allocation7 + $0x78] sm:$0xff]
    %109 = vmatprep.subr.mxu0 0.0
    %110 = vmatpush1.msra.mxu0 %v108
    %111 = vmatprep.subr.mxu0 0.0
    %112 = vmatpush1.msra.mxu0 %v107
    %113 = vmatprep.subr.mxu0 0.0
    %114 = vmatpush1.msra.mxu0 %v106
    %115 = vmatprep.subr.mxu0 0.0
    %116 = vmatpush1.msra.mxu0 %v105
    %117 = vmatprep.subr.mxu0 0.0
    %118 = vmatpush1.msra.mxu0 %v104
    %119 = vmatprep.subr.mxu0 0.0
    %120 = vmatpush1.msra.mxu0 %v103
    %121 = vmatprep.subr.mxu0 0.0
    %122 = vmatpush1.msra.mxu0 %v102
    %123 = vmatprep.subr.mxu0 0.0
    %124 = vmatpush1.msra.mxu0 %v101
    %125 = vmatprep.subr.mxu0 0.0
    %126 = vmatpush1.msra.mxu0 %v100
    %127 = vmatprep.subr.mxu0 0.0
    %128 = vmatpush1.msra.mxu0 %v99
    %129 = vmatprep.subr.mxu0 0.0
    %130 = vmatpush1.msra.mxu0 %v98
    %131 = vmatprep.subr.mxu0 0.0
    %132 = vmatpush1.msra.mxu0 %v97
    %133 = vmatprep.subr.mxu0 0.0
    %134 = vmatpush1.msra.mxu0 %v96
    %135 = vmatprep.subr.mxu0 0.0
    %136 = vmatpush1.msra.mxu0 %v95
    %137 = vmatprep.subr.mxu0 0.0
    %138 = vmatpush1.msra.mxu0 %v94
    %139 = vmatprep.subr.mxu0 0.0
    %140 = vmatpush1.msra.mxu0 %v93
    %141 = vmatprep.subr.mxu0 0.0
    %142 = vmatpush2.msra.mxu0 0.0
    %143 = vmatprep.subr.mxu0 0.0
    %144 = vmatpush2.msra.mxu0 0.0
    %145 = vmatprep.subr.mxu0 0.0
    %146 = vmatpush2.msra.mxu0 0.0
    %147 = vmatprep.subr.mxu0 0.0
    %148 = vmatpush2.msra.mxu0 0.0
    %149 = vmatprep.subr.mxu0 0.0
    %150 = vmatpush2.msra.mxu0 0.0
    %151 = vmatprep.subr.mxu0 0.0
    %152 = vmatpush2.msra.mxu0 0.0
    %153 = vmatprep.subr.mxu0 0.0
    %154 = vmatpush2.msra.mxu0 0.0
    %155 = vmatprep.subr.mxu0 0.0
    %156 = vmatpush2.msra.mxu0 0.0
    %157 = vmatprep.subr.mxu0 0.0
    %158 = vmatpush2.msra.mxu0 0.0
    %159 = vmatprep.subr.mxu0 0.0
    %160 = vmatpush2.msra.mxu0 0.0
    %161 = vmatprep.subr.mxu0 0.0
    %162 = vmatpush2.msra.mxu0 0.0
    %163 = vmatprep.subr.mxu0 0.0
    %164 = vmatpush2.msra.mxu0 0.0
    %165 = vmatprep.subr.mxu0 0.0
    %166 = vmatpush2.msra.mxu0 0.0
    %167 = vmatprep.subr.mxu0 0.0
    %168 = vmatpush2.msra.mxu0 0.0
    %169 = vmatprep.subr.mxu0 0.0
    %170 = vmatpush2.msra.mxu0 0.0
    %171 = vmatprep.subr.mxu0 0.0
    %172 = vmatpush2.msra.mxu0 0.0
    %173 = vmatprep.mubr.f32.mxu0 0.0
    %174 = vmatmul.mubr.f32.gmra.mxu0 %v89
    %v175 = vpop.f32.mrf.mxu0
    %v176 = vadd.f32 0.0, %v175
    %v177 = vpop.f32.mrf.mxu0
    %178 = vmatprep.mubr.f32.mxu0 0.0
    %179 = vmatmul.mubr.f32.gmra.mxu0 %v90
    %v180 = vpop.f32.mrf.mxu0
    %v181 = vadd.f32 0.0, %v180
    %v182 = vpop.f32.mrf.mxu0
    %183 = vdwg.mxu0
    %v184 = vadd.f32 %v91, %v176
    %v185 = vadd.f32 %v92, %v181
    %186 = vst [vmem:[#allocation2] sm:$0xff] %v184
    %187 = vst [vmem:[#allocation2 + $0x8] sm:$0xff] %v185
    // Predicated region
    $region46: #{tpu_custom_call.1} parent=1 // pred_check
      %p188 = pneg %p82
    $region47: #{tpu_custom_call.1} parent=1 // pred_check_branch
      %190 = sbr.rel (%p188) target = $region49
    $region48: #{tpu_custom_call.1} parent=1 // pred_region
      %s191 = smul.u32 0, 128
      %s192 = scalar_lea.vmem [#allocation9], %s191
      %v193 = vld [vmem:[%s192] sm:$0xff]
      %v194 = vld [vmem:[%s192 + $0x8] sm:$0xff]
      %v195 = vld [vmem:[%s192 + $0x10] sm:$0xff]
      %v196 = vld [vmem:[%s192 + $0x18] sm:$0xff]
      %v197 = vld [vmem:[%s192 + $0x20] sm:$0xff]
      %v198 = vld [vmem:[%s192 + $0x28] sm:$0xff]
      %v199 = vld [vmem:[%s192 + $0x30] sm:$0xff]
      %v200 = vld [vmem:[%s192 + $0x38] sm:$0xff]
      %v201 = vld [vmem:[%s192 + $0x40] sm:$0xff]
      %v202 = vld [vmem:[%s192 + $0x48] sm:$0xff]
      %v203 = vld [vmem:[%s192 + $0x50] sm:$0xff]
      %v204 = vld [vmem:[%s192 + $0x58] sm:$0xff]
      %v205 = vld [vmem:[%s192 + $0x60] sm:$0xff]
      %v206 = vld [vmem:[%s192 + $0x68] sm:$0xff]
      %v207 = vld [vmem:[%s192 + $0x70] sm:$0xff]
      %v208 = vld [vmem:[%s192 + $0x78] sm:$0xff]
      %v209 = vld [vmem:[#allocation3] sm:$0xff]
      %v210 = vld [vmem:[#allocation3 + $0x8] sm:$0xff]
      %211 = vmatprep.subr.mxu0 0.0
      %212 = vmatpush1.msra.mxu0 %v208
      %213 = vmatprep.subr.mxu0 0.0
      %214 = vmatpush1.msra.mxu0 %v207
      %215 = vmatprep.subr.mxu0 0.0
      %216 = vmatpush1.msra.mxu0 %v206
      %217 = vmatprep.subr.mxu0 0.0
      %218 = vmatpush1.msra.mxu0 %v205
      %219 = vmatprep.subr.mxu0 0.0
      %220 = vmatpush1.msra.mxu0 %v204
      %221 = vmatprep.subr.mxu0 0.0
      %222 = vmatpush1.msra.mxu0 %v203
      %223 = vmatprep.subr.mxu0 0.0
      %224 = vmatpush1.msra.mxu0 %v202
      %225 = vmatprep.subr.mxu0 0.0
      %226 = vmatpush1.msra.mxu0 %v201
      %227 = vmatprep.subr.mxu0 0.0
      %228 = vmatpush1.msra.mxu0 %v200
      %229 = vmatprep.subr.mxu0 0.0
      %230 = vmatpush1.msra.mxu0 %v199
      %231 = vmatprep.subr.mxu0 0.0
      %232 = vmatpush1.msra.mxu0 %v198
      %233 = vmatprep.subr.mxu0 0.0
      %234 = vmatpush1.msra.mxu0 %v197
      %235 = vmatprep.subr.mxu0 0.0
      %236 = vmatpush1.msra.mxu0 %v196
      %237 = vmatprep.subr.mxu0 0.0
      %238 = vmatpush1.msra.mxu0 %v195
      %239 = vmatprep.subr.mxu0 0.0
      %240 = vmatpush1.msra.mxu0 %v194
      %241 = vmatprep.subr.mxu0 0.0
      %242 = vmatpush1.msra.mxu0 %v193
      %243 = vmatprep.subr.mxu0 0.0
      %244 = vmatpush2.msra.mxu0 0.0
      %245 = vmatprep.subr.mxu0 0.0
      %246 = vmatpush2.msra.mxu0 0.0
      %247 = vmatprep.subr.mxu0 0.0
      %248 = vmatpush2.msra.mxu0 0.0
      %249 = vmatprep.subr.mxu0 0.0
      %250 = vmatpush2.msra.mxu0 0.0
      %251 = vmatprep.subr.mxu0 0.0
      %252 = vmatpush2.msra.mxu0 0.0
      %253 = vmatprep.subr.mxu0 0.0
      %254 = vmatpush2.msra.mxu0 0.0
      %255 = vmatprep.subr.mxu0 0.0
      %256 = vmatpush2.msra.mxu0 0.0
      %257 = vmatprep.subr.mxu0 0.0
      %258 = vmatpush2.msra.mxu0 0.0
      %259 = vmatprep.subr.mxu0 0.0
      %260 = vmatpush2.msra.mxu0 0.0
      %261 = vmatprep.subr.mxu0 0.0
      %262 = vmatpush2.msra.mxu0 0.0
      %263 = vmatprep.subr.mxu0 0.0
      %264 = vmatpush2.msra.mxu0 0.0
      %265 = vmatprep.subr.mxu0 0.0
      %266 = vmatpush2.msra.mxu0 0.0
      %267 = vmatprep.subr.mxu0 0.0
      %268 = vmatpush2.msra.mxu0 0.0
      %269 = vmatprep.subr.mxu0 0.0
      %270 = vmatpush2.msra.mxu0 0.0
      %271 = vmatprep.subr.mxu0 0.0
      %272 = vmatpush2.msra.mxu0 0.0
      %273 = vmatprep.subr.mxu0 0.0
      %274 = vmatpush2.msra.mxu0 0.0
      %275 = vmatprep.mubr.f32.mxu0 0.0
      %276 = vmatmul.mubr.f32.gmra.mxu0 %v89
      %v277 = vpop.f32.mrf.mxu0
      %v278 = vadd.f32 0.0, %v277
      %v279 = vpop.f32.mrf.mxu0
      %280 = vmatprep.mubr.f32.mxu0 0.0
      %281 = vmatmul.mubr.f32.gmra.mxu0 %v90
      %v282 = vpop.f32.mrf.mxu0
      %v283 = vadd.f32 0.0, %v282
      %v284 = vpop.f32.mrf.mxu0
      %285 = vdwg.mxu0
      %v286 = vadd.f32 %v209, %v278
      %v287 = vadd.f32 %v210, %v283
      %288 = vst [vmem:[#allocation3] sm:$0xff] %v286
      %289 = vst [vmem:[#allocation3 + $0x8] sm:$0xff] %v287
    $region49: #{tpu_custom_call.1} parent=1 // pred_fallthru
      _
    // Predicated region
    $region50: #{tpu_custom_call.1} parent=1 // pred_check
      %p290 = pneg %p76
    $region51: #{tpu_custom_call.1} parent=1 // pred_check_branch
      %292 = sbr.rel (%p290) target = $region53
    $region52: #{tpu_custom_call.1} parent=1 // pred_region
      %v293 = vld [vmem:[#allocation3] sm:$0xff]
      %v294 = vld [vmem:[#allocation3 + $0x8] sm:$0xff]
      %v295 = vld [vmem:[#allocation10] sm:$0xff]
      %v296 = vld [vmem:[#allocation10 + $0x8] sm:$0xff]
      %v297 = vld [vmem:[#allocation10 + $0x10] sm:$0xff]
      %v298 = vld [vmem:[#allocation10 + $0x18] sm:$0xff]
      %v299 = vld [vmem:[#allocation10 + $0x20] sm:$0xff]
      %v300 = vld [vmem:[#allocation10 + $0x28] sm:$0xff]
      %v301 = vld [vmem:[#allocation10 + $0x30] sm:$0xff]
      %v302 = vld [vmem:[#allocation10 + $0x38] sm:$0xff]
      %v303 = vld [vmem:[#allocation10 + $0x40] sm:$0xff]
      %v304 = vld [vmem:[#allocation10 + $0x48] sm:$0xff]
      %v305 = vld [vmem:[#allocation10 + $0x50] sm:$0xff]
      %v306 = vld [vmem:[#allocation10 + $0x58] sm:$0xff]
      %v307 = vld [vmem:[#allocation10 + $0x60] sm:$0xff]
      %v308 = vld [vmem:[#allocation10 + $0x68] sm:$0xff]
      %v309 = vld [vmem:[#allocation10 + $0x70] sm:$0xff]
      %v310 = vld [vmem:[#allocation10 + $0x78] sm:$0xff]
      %311 = vmatprep.subr.mxu0 0.0
      %312 = vmatpush1.msra.mxu0 %v310
      %313 = vmatprep.subr.mxu0 0.0
      %314 = vmatpush1.msra.mxu0 %v309
      %315 = vmatprep.subr.mxu0 0.0
      %316 = vmatpush1.msra.mxu0 %v308
      %317 = vmatprep.subr.mxu0 0.0
      %318 = vmatpush1.msra.mxu0 %v307
      %319 = vmatprep.subr.mxu0 0.0
      %320 = vmatpush1.msra.mxu0 %v306
      %321 = vmatprep.subr.mxu0 0.0
      %322 = vmatpush1.msra.mxu0 %v305
      %323 = vmatprep.subr.mxu0 0.0
      %324 = vmatpush1.msra.mxu0 %v304
      %325 = vmatprep.subr.mxu0 0.0
      %326 = vmatpush1.msra.mxu0 %v303
      %327 = vmatprep.subr.mxu0 0.0
      %328 = vmatpush1.msra.mxu0 %v302
      %329 = vmatprep.subr.mxu0 0.0
      %330 = vmatpush1.msra.mxu0 %v301
      %331 = vmatprep.subr.mxu0 0.0
      %332 = vmatpush1.msra.mxu0 %v300
      %333 = vmatprep.subr.mxu0 0.0
      %334 = vmatpush1.msra.mxu0 %v299
      %335 = vmatprep.subr.mxu0 0.0
      %336 = vmatpush1.msra.mxu0 %v298
      %337 = vmatprep.subr.mxu0 0.0
      %338 = vmatpush1.msra.mxu0 %v297
      %339 = vmatprep.subr.mxu0 0.0
      %340 = vmatpush1.msra.mxu0 %v296
      %341 = vmatprep.subr.mxu0 0.0
      %342 = vmatpush1.msra.mxu0 %v295
      %343 = vmatprep.subr.mxu0 0.0
      %344 = vmatpush2.msra.mxu0 0.0
      %345 = vmatprep.subr.mxu0 0.0
      %346 = vmatpush2.msra.mxu0 0.0
      %347 = vmatprep.subr.mxu0 0.0
      %348 = vmatpush2.msra.mxu0 0.0
      %349 = vmatprep.subr.mxu0 0.0
      %350 = vmatpush2.msra.mxu0 0.0
      %351 = vmatprep.subr.mxu0 0.0
      %352 = vmatpush2.msra.mxu0 0.0
      %353 = vmatprep.subr.mxu0 0.0
      %354 = vmatpush2.msra.mxu0 0.0
      %355 = vmatprep.subr.mxu0 0.0
      %356 = vmatpush2.msra.mxu0 0.0
      %357 = vmatprep.subr.mxu0 0.0
      %358 = vmatpush2.msra.mxu0 0.0
      %359 = vmatprep.subr.mxu0 0.0
      %360 = vmatpush2.msra.mxu0 0.0
      %361 = vmatprep.subr.mxu0 0.0
      %362 = vmatpush2.msra.mxu0 0.0
      %363 = vmatprep.subr.mxu0 0.0
      %364 = vmatpush2.msra.mxu0 0.0
      %365 = vmatprep.subr.mxu0 0.0
      %366 = vmatpush2.msra.mxu0 0.0
      %367 = vmatprep.subr.mxu0 0.0
      %368 = vmatpush2.msra.mxu0 0.0
      %369 = vmatprep.subr.mxu0 0.0
      %370 = vmatpush2.msra.mxu0 0.0
      %371 = vmatprep.subr.mxu0 0.0
      %372 = vmatpush2.msra.mxu0 0.0
      %373 = vmatprep.subr.mxu0 0.0
      %374 = vmatpush2.msra.mxu0 0.0
      %375 = vmatprep.mubr.f32.mxu0 0.0
      %376 = vmatmul.mubr.f32.gmra.mxu0 %v293
      %v377 = vpop.f32.mrf.mxu0
      %v378 = vadd.f32 0.0, %v377
      %v379 = vpop.f32.mrf.mxu0
      %380 = vmatprep.mubr.f32.mxu0 0.0
      %381 = vmatmul.mubr.f32.gmra.mxu0 %v294
      %v382 = vpop.f32.mrf.mxu0
      %v383 = vadd.f32 0.0, %v382
      %v384 = vpop.f32.mrf.mxu0
      %385 = vdwg.mxu0
      %v386 = vld [vmem:[#allocation2] sm:$0xff]
      %v387 = vld [vmem:[#allocation2 + $0x8] sm:$0xff]
      %v388 = vadd.f32 %v386, %v378
      %v389 = vadd.f32 %v387, %v383
      %v390 = vld [vmem:[%s2] sm:$0x1]
      %v392 = vlaneseq
      %v393 = vshrl.u32 %v392, 7
      %v394 = vsub.s32 0, %v393
      %v395 = vrot.slane %v390, %v394
      %v397 = vadd.f32 %v388, %v395
      %v398 = vadd.f32 %v389, %v395
      %399 = vst [vmem:[#allocation12] sm:$0xff] %v397
      %400 = vst [vmem:[#allocation12 + $0x8] sm:$0xff] %v398
    $region53: #{tpu_custom_call.1} parent=1 // pred_fallthru
      _
    // Predicated region
    $region54: #{tpu_custom_call.1} parent=1 // pred_check
      _
    $region55: #{tpu_custom_call.1} parent=1 // pred_check_branch
      %402 = sbr.rel (0) target = $region57
    $region56: #{tpu_custom_call.1} parent=1 // pred_region
      %s404 = ssub.s32 256, 256
      %405 = vsyncadd [#allocation6], %s404
      %s406 = sshll.u32 [#allocation12], 4
      %s407 = int_to_ptr.vmem [resolvable:$true] %s406
      %412 = dma.vmem_to_hbm [thread:$0]  %s407, 256, %s5, [#allocation6], 128, 128, 8
    $region57: #{tpu_custom_call.1} parent=1 // pred_fallthru
      _
    // Predicated region
    $region58: #{tpu_custom_call.1} parent=1 // pred_check
      _
    $region59: #{tpu_custom_call.1} parent=1 // pred_check_branch
      %414 = sbr.rel (0) target = $region61
    $region60: #{tpu_custom_call.1} parent=1 // pred_region
      %415 = dma.done [#allocation6], 256
    $region61: #{tpu_custom_call.1} parent=1 // pred_fallthru
      _
    %416 = vsyncpa [#allocation5], 1
    %417 = vsyncpa [#allocation8], 1
    %418 = vsyncpa [#allocation11], 1
    %419 = vsyncpa [#allocation6], 1

</llo_original>
